<compile_context>
chip_gen: v6e
topology: v6e:2x2x1
jax: 0.10.0
libtpu: 0.0.40
codegen_flags: <defaults>
</compile_context>

<pallas_src>
import jax
import jax.numpy as jnp
from jax.experimental import pallas as pl
from jax.experimental.pallas import tpu as pltpu


def _user_model_kernel(decay_ref, ts_ref, hist_ref, bias_ref, out_ref):
    """decay_ref: (1,)        f32 SMEM
       ts_ref:    (TB, S)     f32 VMEM
       hist_ref:  (TB, S, D)  f32 VMEM (streamed / double-buffered)
       bias_ref:  (1, D)      f32 VMEM (same block every step -> resident)
       out_ref:   (TB, D)     f32 VMEM
    """
    decay = decay_ref[0]

    # Time-decay weights over the sequence axis. The softmax-style max shift
    # cancels after normalization (mathematically identical to the reference)
    # and guarantees denom >= 1 even on padded remainder rows.
    z = -decay * ts_ref[...]                               # (TB, S)
    z = z - jnp.max(z, axis=-1, keepdims=True)
    w = jnp.exp(z)
    w = w / jnp.sum(w, axis=-1, keepdims=True)             # exact divide

    # Weighted sum over S: VPU broadcast-multiply + sublane reduce -> (TB, D).
    emb = jnp.sum(w[:, :, None] * hist_ref[...], axis=1)

    out_ref[...] = emb + bias_ref[...]


def _pick_batch_tile(B, S, D, hist_tile_bytes):
    """Largest batch tile whose f32 history slab fits hist_tile_bytes,
    rounded to a multiple of 8 sublanes (or the full batch when B is small).
    Prefers a divisor of B so no ragged remainder block is generated."""
    rows = max(1, hist_tile_bytes // (4 * S * D))
    if rows >= B or B <= 8:
        return B
    tb = min(max(8, (rows // 8) * 8), B)
    for cand in range(tb - (tb % 8), 7, -8):               # multiple-of-8 divisor of B
        if B % cand == 0:
            return cand
    return tb  # ragged last block: reads are padded, writes masked -> still correct


def enhanced_user_model(user_history, time_stamps, interests, region_prefs,
                        params, *, hist_tile_bytes=8 * 1024 * 1024):
    """user_history: (B, S, D) f32; time_stamps: (B, S) f32;
    interests: (n_interests,) f32; region_prefs: (n_regions,) f32.

    hist_tile_bytes: per-block user_history slab (8 MiB default works across
    v5e/v6e/v7x; raise toward 16-24 MiB on v6e, keep <= ~12 MiB on v7x)."""
    B, S, D = user_history.shape
    n_int = params["pw1"].shape[0]
    n_reg = params["cw1"].shape[0]
    if interests.shape != (n_int,):
        raise ValueError(f"interests must have shape ({n_int},), got {interests.shape}")
    if region_prefs.shape != (n_reg,):
        raise ValueError(f"region_prefs must have shape ({n_reg},), got {region_prefs.shape}")
    if params["pw2"].shape[1] != D or params["cw2"].shape[1] != D:
        raise ValueError("final broadcast add requires input_dim == hidden_dim")

    # Batch-independent encoder branches: pre-fused into one (1, D) bias
    # outside the hot kernel (they are per-call constants).
    ph = jnp.maximum(interests.astype(jnp.float32) @ params["pw1"] + params["pb1"], 0.0)
    pf = ph @ params["pw2"] + params["pb2"]
    ch = jnp.maximum(region_prefs.astype(jnp.float32) @ params["cw1"] + params["cb1"], 0.0)
    cf = ch @ params["cw2"] + params["cb2"]
    bias = (pf + cf).astype(jnp.float32).reshape(1, D)

    hist = user_history.astype(jnp.float32)
    ts = time_stamps.astype(jnp.float32)                   # (B, S), sublane-dense blocks
    decay = params["time_decay"].astype(jnp.float32).reshape(1)

    tb = _pick_batch_tile(B, S, D, hist_tile_bytes)
    grid = (pl.cdiv(B, tb),)

    # Real double-buffered footprint: 2 x (hist + ts + out tiles) + one
    # hist-sized VMEM temp for the weighted history + resident bias + headroom.
    tile_bytes = 4 * (tb * S * D + tb * S + tb * D)
    vmem_limit = 2 * tile_bytes + 4 * tb * S * D + 4 * D + (2 << 20)
    vmem_limit = min(max(vmem_limit, 16 << 20), 64 << 20)  # stay within v7x physical VMEM

    cost = pl.CostEstimate(
        flops=2 * B * S * D,                               # multiply + reduce
        transcendentals=B * S,                             # exp
        bytes_accessed=4 * (B * S * D + B * S + B * D + D),
    )

    out = pl.pallas_call(
        _user_model_kernel,
        out_shape=jax.ShapeDtypeStruct((B, D), jnp.float32),
        grid=grid,
        in_specs=[
            pl.BlockSpec(memory_space=pltpu.MemorySpace.SMEM),   # time_decay scalar
            pl.BlockSpec((tb, S), lambda i: (i, 0)),             # time_stamps
            pl.BlockSpec((tb, S, D), lambda i: (i, 0, 0)),       # user_history (streamed)
            pl.BlockSpec((1, D), lambda i: (0, 0)),              # fused encoder bias
        ],
        out_specs=pl.BlockSpec((tb, D), lambda i: (i, 0)),
        compiler_params=pltpu.CompilerParams(
            dimension_semantics=("parallel",),                   # v7x dual-TC sharding
            vmem_limit_bytes=vmem_limit),
        cost_estimate=cost,
    )(decay, ts, hist, bias)
    return out


def init_params(key, hidden_dim=128, n_interests=5, n_regions=5):
    ks = jax.random.split(key, 8)
    scale = 0.1
    return {
        "time_decay": jnp.array(0.5, dtype=jnp.float32),
        "pw1": scale * jax.random.normal(ks[0], (n_interests, 64), jnp.float32),
        "pb1": scale * jax.random.normal(ks[1], (64,), jnp.float32),
        "pw2": scale * jax.random.normal(ks[2], (64, hidden_dim), jnp.float32),
        "pb2": scale * jax.random.normal(ks[3], (hidden_dim,), jnp.float32),
        "cw1": scale * jax.random.normal(ks[4], (n_regions, 128), jnp.float32),
        "cb1": scale * jax.random.normal(ks[5], (128,), jnp.float32),
        "cw2": scale * jax.random.normal(ks[6], (128, hidden_dim), jnp.float32),
        "cb2": scale * jax.random.normal(ks[7], (hidden_dim,), jnp.float32),
    }


def reference_jax(user_history, time_stamps, interests, region_prefs, p):
    w = jnp.exp(-p["time_decay"] * time_stamps)
    w = w / jnp.sum(w, axis=1, keepdims=True)
    emb = jnp.einsum("bs,bsd->bd", w, user_history)
    ph = jnp.maximum(interests @ p["pw1"] + p["pb1"], 0.0)
    pf = ph @ p["pw2"] + p["pb2"]
    ch = jnp.maximum(region_prefs @ p["cw1"] + p["cb1"], 0.0)
    cf = ch @ p["cw2"] + p["cb2"]
    return emb + pf[None, :] + cf[None, :]


if __name__ == "__main__":
    # input_dim == hidden_dim == 128: required by the forward's broadcast add,
    # and keeps the output lane-dense (last dim a multiple of 128).
    B, S, D = 2, 8, 128
    key = jax.random.PRNGKey(0)
    k_hist, k_ts, k_int, k_reg, k_params = jax.random.split(key, 5)

    user_history = jax.random.normal(k_hist, (B, S, D), jnp.float32)
    time_stamps = jax.random.uniform(k_ts, (B, S), jnp.float32, 0.0, 5.0)
    interests = jax.random.uniform(k_int, (5,), jnp.float32)      # 5 interest categories
    region_prefs = jax.random.uniform(k_reg, (5,), jnp.float32)   # 5 BRI regions
    params = init_params(k_params, hidden_dim=D)

    out = enhanced_user_model(user_history, time_stamps, interests, region_prefs, params)
    out = jax.block_until_ready(out)

    ref = reference_jax(user_history, time_stamps, interests, region_prefs, params)
    assert out.shape == (B, D)
    assert jnp.allclose(out, ref, atol=1e-5, rtol=1e-5), "mismatch vs JAX reference"
    print("KERNEL_OK")
</pallas_src>

<mosaic_0001>
module attributes {stable_mosaic.version = 11 : i64} {
  func.func @_user_model_kernel(%arg0: i32, %arg1: memref<1xf32, #tpu.memory_space<smem>>, %arg2: memref<2x8xf32, #tpu.memory_space<vmem>>, %arg3: memref<2x8x128xf32, #tpu.memory_space<vmem>>, %arg4: memref<1x128xf32, #tpu.memory_space<vmem>>, %arg5: memref<2x128xf32, #tpu.memory_space<vmem>>) attributes {dimension_semantics = [#tpu.dimension_semantics<parallel>], iteration_bounds = array<i64: 1>, scalar_prefetch = 0 : i64, scratch_operands = 0 : i64, tpu.core_type = #tpu.core_type<tc>, window_params = [{transform_indices = @transform_0, window_bounds = array<i64: 1>}, {transform_indices = @transform_1, window_bounds = array<i64: 2, 8>}, {transform_indices = @transform_2, window_bounds = array<i64: 2, 8, 128>}, {pipeline_mode = #tpu.pipeline_mode<synchronous>, transform_indices = @transform_3, window_bounds = array<i64: 1, 128>}, {transform_indices = @transform_4, window_bounds = array<i64: 2, 128>}]} {
    %c0 = arith.constant 0 : index
    %0 = memref.load %arg1[%c0] : memref<1xf32, #tpu.memory_space<smem>>
    %cst = arith.constant 0.000000e+00 : f32
    %1 = arith.subf %cst, %0 : f32
    %c0_0 = arith.constant 0 : index
    %c0_1 = arith.constant 0 : index
    %2 = vector.load %arg2[%c0_0, %c0_1] : memref<2x8xf32, #tpu.memory_space<vmem>>, vector<2x8xf32>
    %3 = vector.broadcast %1 : f32 to vector<2x8xf32>
    %4 = arith.mulf %3, %2 : vector<2x8xf32>
    %cst_2 = arith.constant dense<0xFF800000> : vector<2xf32>
    %5 = vector.multi_reduction <maximumf>, %4, %cst_2 [1] : vector<2x8xf32> to vector<2xf32>
    %6 = vector.shape_cast %5 : vector<2xf32> to vector<2x1xf32>
    %7 = vector.broadcast %6 : vector<2x1xf32> to vector<2x8xf32>
    %8 = arith.subf %4, %7 : vector<2x8xf32>
    %9 = math.exp %8 : vector<2x8xf32>
    %cst_3 = arith.constant dense<0.000000e+00> : vector<2xf32>
    %10 = vector.multi_reduction <add>, %9, %cst_3 [1] : vector<2x8xf32> to vector<2xf32>
    %11 = vector.shape_cast %10 : vector<2xf32> to vector<2x1xf32>
    %12 = vector.broadcast %11 : vector<2x1xf32> to vector<2x8xf32>
    %13 = arith.divf %9, %12 : vector<2x8xf32>
    %14 = vector.shape_cast %13 : vector<2x8xf32> to vector<2x8x1xf32>
    %c0_4 = arith.constant 0 : index
    %c0_5 = arith.constant 0 : index
    %c0_6 = arith.constant 0 : index
    %15 = vector.load %arg3[%c0_4, %c0_5, %c0_6] : memref<2x8x128xf32, #tpu.memory_space<vmem>>, vector<2x8x128xf32>
    %16 = vector.broadcast %14 : vector<2x8x1xf32> to vector<2x8x128xf32>
    %17 = arith.mulf %16, %15 : vector<2x8x128xf32>
    %cst_7 = arith.constant dense<0.000000e+00> : vector<2x128xf32>
    %18 = vector.multi_reduction <add>, %17, %cst_7 [1] : vector<2x8x128xf32> to vector<2x128xf32>
    %c0_8 = arith.constant 0 : index
    %c0_9 = arith.constant 0 : index
    %19 = vector.load %arg4[%c0_8, %c0_9] : memref<1x128xf32, #tpu.memory_space<vmem>>, vector<1x128xf32>
    %20 = vector.broadcast %19 : vector<1x128xf32> to vector<2x128xf32>
    %21 = arith.addf %18, %20 : vector<2x128xf32>
    %c0_10 = arith.constant 0 : index
    %c0_11 = arith.constant 0 : index
    %22 = vector.load %arg5[%c0_10, %c0_11] : memref<2x128xf32, #tpu.memory_space<vmem>>, vector<2x128xf32>
    tpu.vector_store %arg5[%c0_10, %c0_11], %21 {strides = array<i32>} : memref<2x128xf32, #tpu.memory_space<vmem>>, vector<2x128xf32>,
    return
  }
  func.func @transform_0(%arg0: i32) -> i32 {
    %c0_i32 = arith.constant 0 : i32
    %c0_i32_0 = arith.constant 0 : i32
    return %c0_i32 : i32
  }
  func.func @transform_1(%arg0: i32) -> (i32, i32) {
    %c0_i32 = arith.constant 0 : i32
    %c0_i32_0 = arith.constant 0 : i32
    return %arg0, %c0_i32 : i32, i32
  }
  func.func @transform_2(%arg0: i32) -> (i32, i32, i32) {
    %c0_i32 = arith.constant 0 : i32
    %c0_i32_0 = arith.constant 0 : i32
    %c0_i32_1 = arith.constant 0 : i32
    return %arg0, %c0_i32, %c0_i32_0 : i32, i32, i32
  }
  func.func @transform_3(%arg0: i32) -> (i32, i32) {
    %c0_i32 = arith.constant 0 : i32
    %c0_i32_0 = arith.constant 0 : i32
    %c0_i32_1 = arith.constant 0 : i32
    return %c0_i32, %c0_i32_0 : i32, i32
  }
  func.func @transform_4(%arg0: i32) -> (i32, i32) {
    %c0_i32 = arith.constant 0 : i32
    %c0_i32_0 = arith.constant 0 : i32
    return %arg0, %c0_i32 : i32, i32
  }
}

</mosaic_0001>

<llo_original>
// kernel: tpu_custom_call.1
$region0: #{tpu_custom_call.1}
  #allocation0 [shape = 'u32[]', space=smem, size = 0x4, offset = 0x4, fixed_abs, tag = 'smem constant byte address 0x4 - core index']
  #allocation1 [shape = 'u32[144,128]{1,0:T(1,128)}', space=vmem, size = 0x12000, scoped, tag = 'internal scratch']
  #allocation2 [shape = 'f32[1]{0:T(128)S(6)}', space=smem, size = 0x200, scoped, tag = 'scoped memory for tpu_custom_call.1']
  %s0 = inlined_call_operand.<no memory space> [shape: f32[1], index: 0, kind: input, shape index: {}]
  %s1 = inlined_call_operand.vmem [shape: f32[2,8], index: 1, kind: input, shape index: {}]
  %s2 = inlined_call_operand.hbm [shape: f32[2,8,128], index: 2, kind: input, shape index: {}]
  %s3 = inlined_call_operand.vmem [shape: f32[1,128], index: 3, kind: input, shape index: {}]
  %s4 = inlined_call_operand.hbm [shape: f32[2,128], index: 4, kind: output, shape index: {}]
  %s5 = sld [smem:[#allocation0]]
  $region30: #{tpu_custom_call.1} parent=0
    _
  %s7 = ssub.s32 1, %s5
  %s8 = scalar_select 0, %s7, %s5
  %9 = sst [smem:[#allocation2]] %s0
  $region1: #{tpu_custom_call.1} parent=0
    #allocation3 [shape = 'u8[8192]{0}', space=vmem, size = 0x2000, scoped, tag = 'input window, operand 2, single buffered']
    #allocation4 [shape = 's32[1]{0}', space=sflag, size = 0x4, scoped, tag = 'scoped memory for tpu_custom_call.1']
    #allocation5 [shape = 's32[1]{0}', space=sflag, size = 0x4, scoped, tag = 'scoped memory for tpu_custom_call.1']
    #allocation6 [shape = 'u8[1024]{0}', space=vmem, size = 0x400, scoped, tag = 'output window, operand 0, single buffered']
    %10 = vsyncpa [#allocation4], 0
    %11 = vsyncpa [#allocation5], 0
    // Predicated region
    $region2: #{tpu_custom_call.1} parent=1 // pred_check
      _
    $region3: #{tpu_custom_call.1} parent=1 // pred_check_branch
      %13 = sbr.rel (0) target = $region5
    $region4: #{tpu_custom_call.1} parent=1 // pred_region
      _
    $region5: #{tpu_custom_call.1} parent=1 // pred_fallthru
      _
    // Predicated region
    $region6: #{tpu_custom_call.1} parent=1 // pred_check
      _
    $region7: #{tpu_custom_call.1} parent=1 // pred_check_branch
      %15 = sbr.rel (0) target = $region9
    $region8: #{tpu_custom_call.1} parent=1 // pred_region
      _
    $region9: #{tpu_custom_call.1} parent=1 // pred_fallthru
      _
    // Predicated region
    $region10: #{tpu_custom_call.1} parent=1 // pred_check
      _
    $region11: #{tpu_custom_call.1} parent=1 // pred_check_branch
      %17 = sbr.rel (0) target = $region13
    $region12: #{tpu_custom_call.1} parent=1 // pred_region
      %s19 = ssub.s32 256, 256
      %20 = vsyncadd [#allocation4], %s19
      %s21 = sshll.u32 [#allocation3], 4
      %s22 = int_to_ptr.vmem [resolvable:$true] %s21
      %27 = dma.hbm_to_vmem [thread:$0]  %s2, 256, %s22, [#allocation4], 128, 128, 8
    $region13: #{tpu_custom_call.1} parent=1 // pred_fallthru
      _
    // Predicated region
    $region14: #{tpu_custom_call.1} parent=1 // pred_check
      _
    $region15: #{tpu_custom_call.1} parent=1 // pred_check_branch
      %29 = sbr.rel (0) target = $region17
    $region16: #{tpu_custom_call.1} parent=1 // pred_region
      _
    $region17: #{tpu_custom_call.1} parent=1 // pred_fallthru
      _
    // Predicated region
    $region18: #{tpu_custom_call.1} parent=1 // pred_check
      _
    $region19: #{tpu_custom_call.1} parent=1 // pred_check_branch
      %31 = sbr.rel (0) target = $region21
    $region20: #{tpu_custom_call.1} parent=1 // pred_region
      %32 = dma.done [#allocation4], 256
    $region21: #{tpu_custom_call.1} parent=1 // pred_fallthru
      _
    %s33 = sld [smem:[#allocation2]]
    %s34 = ssub.f32 0.0, %s33
    %v35 = vld [vmem:[%s1] sm:$0x3]
    %v36 = vstv %s34
    %v37 = vmul.f32 %v36, %v35
    %vm38 = vcmask 58368
    %v39 = vsel %vm38, %v37, -inf
    %40 = vmax.xlane.f32.xlu0 %v39
    %v41 = vpop.xlane.xlu0 %40
    %v42 = vsub.f32 %v37, %v41
    %v43 = vmul.f32 %v42, 1.442695
    %v44 = vpow.pop %v43
    %v45 = vsel %vm38, %v44, 0.0
    %46 = vadd.xlane.f32.xlu0 %v45
    %v47 = vpop.xlane.xlu0 %46
    %v48 = vrcp.pop %v47
    %v49 = vmul.f32 %v44, %v48
    %v50 = vlaneseq
    %v51 = vshrl.u32 %v50, 7
    %v52 = vsub.s32 0, %v51
    %v53 = vrot.slane %v49, %v52
    %55 = vbcast.lane.b32.xlu0 %v53, 256
    %v56 = vpop.permute.xlu0 %55
    %v57 = vlaneseq
    %v58 = vshrl.u32 %v57, 7
    %v59 = vsub.s32 1, %v58
    %v60 = vrot.slane %v49, %v59
    %62 = vbcast.lane.b32.xlu0 %v60, 256
    %v63 = vpop.permute.xlu0 %62
    %v64 = vld [vmem:[#allocation3] sm:$0xff]
    %v65 = vld [vmem:[#allocation3 + $0x8] sm:$0xff]
    %v66 = vmul.f32 %v56, %v64
    %v67 = vmul.f32 %v63, %v65
    %v68 = vrot.slane %v66, 4
    %v69 = vadd.f32 %v66, %v68
    %v70 = vrot.slane %v69, 2
    %v71 = vadd.f32 %v69, %v70
    %v72 = vrot.slane %v71, 1
    %v73 = vadd.f32 %v71, %v72
    %v74 = vrot.slane %v67, 4
    %v75 = vadd.f32 %v67, %v74
    %v76 = vrot.slane %v75, 2
    %v77 = vadd.f32 %v75, %v76
    %v78 = vrot.slane %v77, 1
    %v79 = vadd.f32 %v77, %v78
    %v80 = vld [vmem:[%s3] sm:$0x1]
    %v82 = vlaneseq
    %v83 = vshrl.u32 %v82, 7
    %v84 = vsub.s32 0, %v83
    %v85 = vrot.slane %v80, %v84
    %v87 = vadd.f32 %v73, %v85
    %v88 = vadd.f32 %v79, %v85
    %v91 = vrot.slane %v88, 7
    %vm92 = vcmask 1041409
    %v93 = vsel %vm92, %v91, %v87
    %95 = vst [vmem:[#allocation6] sm:$0x3] %v93
    // Predicated region
    $region22: #{tpu_custom_call.1} parent=1 // pred_check
      _
    $region23: #{tpu_custom_call.1} parent=1 // pred_check_branch
      %97 = sbr.rel (0) target = $region25
    $region24: #{tpu_custom_call.1} parent=1 // pred_region
      %s99 = ssub.s32 32, 32
      %100 = vsyncadd [#allocation5], %s99
      %s102 = sshll.u32 [#allocation6], 4
      %s103 = int_to_ptr.vmem [resolvable:$true] %s102
      %105 = dma.vmem_to_hbm [thread:$0]  %s103, 32, %s4, [#allocation5]
    $region25: #{tpu_custom_call.1} parent=1 // pred_fallthru
      _
    // Predicated region
    $region26: #{tpu_custom_call.1} parent=1 // pred_check
      _
    $region27: #{tpu_custom_call.1} parent=1 // pred_check_branch
      %107 = sbr.rel (0) target = $region29
    $region28: #{tpu_custom_call.1} parent=1 // pred_region
      %108 = dma.done [#allocation5], 32
    $region29: #{tpu_custom_call.1} parent=1 // pred_fallthru
      _
    %109 = vsyncpa [#allocation4], 1
    %110 = vsyncpa [#allocation5], 1

</llo_original>
